<compile_context>
chip_gen: v7x
topology: tpu7x:2x2x1
jax: 0.10.0
libtpu: 0.0.40
codegen_flags: <defaults>
</compile_context>

<pallas_src>
import functools
import math

import jax
import jax.numpy as jnp
from jax import lax
from jax.experimental import pallas as pl
from jax.experimental.pallas import tpu as pltpu


_VMEM_LIMIT_BYTES = 48 * 1024 * 1024   # scoped-VMEM limit requested from Mosaic
_VMEM_BUDGET_BYTES = 40 * 1024 * 1024  # conservative gate (fits v7x 64 MiB/TC)


def _round_up(x: int, m: int) -> int:
    return ((x + m - 1) // m) * m


# ----------------------------------------------------------------------------
# Path 1: resident weight table + one-hot MXU gather (small / medium vocab).
# Everything is laid out feature-major so all loads and the store are
# lane-dense along the row-tile axis TM.
# ----------------------------------------------------------------------------
def _encode_resident_kernel(ids_ref, inv_ref, embT_ref, wT_ref, selT_ref,
                            out_ref):
    """One grid step = TM unique (vocab_id, batch_id) rows.

    ids_ref:  (1, TM)   int32 -- vocab id per row (clipped to [0, V))
    inv_ref:  (1, TM)   f32   -- 1 / count (0 for padded rows)
    embT_ref: (D, TM)   f32   -- summed embeddings, feature-major
    wT_ref:   (O*D, V)  bf16  -- resident weight table, row layout [o*D + d]
    selT_ref: (O, O*D)  f32   -- selection matrix, selT[o, o*D + d] = 1
    out_ref:  (O, TM)   f32   -- lane-dense output tile
    """
    v = wT_ref.shape[1]
    tm = embT_ref.shape[1]
    o = out_ref.shape[0]

    # In-VMEM gather of the per-row weight matrices via one-hot MXU matmul
    # (table fetched once / kept resident; no per-row weight DMAs).
    ids = ids_ref[...]                                       # (1, TM)
    iota_v = lax.broadcasted_iota(jnp.int32, (v, tm), 0)     # (V, TM)
    onehot = (ids == iota_v).astype(wT_ref.dtype)            # bool -> bf16
    wg = jnp.dot(wT_ref[...], onehot,
                 preferred_element_type=jnp.float32)         # (O*D, TM) f32

    # Average in f32 (multiply by precomputed reciprocal counts), replicate the
    # D rows O times along sublanes (aligned copies, no lane rotates), multiply
    # with the gathered weights and contract D -> O with a small MXU matmul.
    e = embT_ref[...] * inv_ref[...]                         # (D, TM) f32
    e_rep = jnp.concatenate([e] * o, axis=0)                 # (O*D, TM)
    acc = jnp.dot(selT_ref[...], e_rep * wg,
                  preferred_element_type=jnp.float32)        # (O, TM)
    out_ref[...] = jnp.tanh(acc)


def _resident_vmem_bytes(tm: int, v: int, d: int, o: int, w_bytes: int) -> int:
    od = o * d
    table = 2 * od * v * w_bytes            # constant-index spec: double-buffered
    sel = 2 * o * od * 4
    tiles = 2 * (tm * 4 + tm * 4 + d * tm * 4 + o * tm * 4)   # ids, inv, embT, out
    interm = v * tm * w_bytes + 3 * od * tm * 4               # onehot, wg, e_rep/prod
    return int(1.25 * (table + sel + tiles + interm))


def _choose_row_tile(n, tile_rows, v, d, o, w_bytes, budget):
    """Pick (TM, N_pad) for the resident path, or None if it cannot fit."""
    if n <= 256:
        tm = _round_up(n, 8)
        if _resident_vmem_bytes(tm, v, d, o, w_bytes) <= budget:
            return tm, tm
        return None
    # Keep >= 2 row tiles so v7x can shard them across its two TensorCores.
    tm = min(tile_rows, _round_up(-(-n // 2), 128))
    while True:
        if _resident_vmem_bytes(tm, v, d, o, w_bytes) <= budget:
            return tm, _round_up(n, tm)
        if tm <= 128:
            return None
        tm = max(128, (tm // 2) // 128 * 128)


# ----------------------------------------------------------------------------
# Path 2: scalar-prefetch row gather (large vocab fallback).  One unique row
# per grid step; the weight row is DMA'd via a data-dependent index_map.
# ----------------------------------------------------------------------------
def _encode_gather_kernel(ids_smem_ref, avg_ref, w_ref, out_ref):
    """avg_ref: (1,1,D) f32 (already averaged), w_ref: (1,D,O), out: (1,1,O)."""
    del ids_smem_ref  # only used by the index_maps
    e = avg_ref[0]                                           # (1, D)
    w = w_ref[0]                                             # (D, O)
    acc = jnp.dot(e, w, preferred_element_type=jnp.float32)  # (1, O)
    out_ref[0] = jnp.tanh(acc)


# ----------------------------------------------------------------------------
# Wrapper (equivalent of Encoder.forward)
# ----------------------------------------------------------------------------
def encoder_forward(vocab_ids, embeddings, encoder_weights, *,
                    tile_rows: int = 512,
                    resident_weight_dtype=jnp.bfloat16,
                    vmem_budget_bytes: int = _VMEM_BUDGET_BYTES,
                    force_path=None):
    """Equivalent of Encoder.forward.

    Args:
      vocab_ids:       (B, S) int32
      embeddings:      (B, S, D) float32
      encoder_weights: (V, D, O) float32
    Returns:
      unique_pairs: (B*S, 2) int32  -- (vocab_id, batch_id), padded rows = -1
      encoded:      (B*S, O) float32 -- tanh(avg_embedding @ W[vocab_id]);
                                         padded rows are exactly 0.
    """
    assert tile_rows % 128 == 0
    B, S = vocab_ids.shape
    D = embeddings.shape[-1]
    V, _, O = encoder_weights.shape
    N = B * S  # static upper bound on #unique (vocab_id, batch_id) pairs

    # ---- glue: dedup + segment-sum (dynamic-shape unique padded to N) ----
    batch_ids = jnp.broadcast_to(
        jnp.arange(B, dtype=vocab_ids.dtype)[:, None], (B, S))
    pairs = jnp.stack([vocab_ids, batch_ids], axis=2).reshape(N, 2)
    flat_emb = embeddings.reshape(N, D).astype(jnp.float32)

    unique_pairs, inverse = jnp.unique(
        pairs, axis=0, return_inverse=True, size=N, fill_value=-1)
    inverse = inverse.reshape(-1)

    counts = jax.ops.segment_sum(
        jnp.ones((N,), jnp.float32), inverse, num_segments=N)
    emb_sum = jax.ops.segment_sum(flat_emb, inverse, num_segments=N)

    gather_ids = jnp.clip(unique_pairs[:, 0], 0, V - 1).astype(jnp.int32)
    # Invariant: padded rows have counts == 0 -> inv_counts == 0, so the
    # (zero) embedding -- not the clipped W[0] -- drives their (zero) output.
    inv_counts = jnp.where(
        counts > 0, 1.0 / jnp.maximum(counts, 1.0), 0.0).astype(jnp.float32)

    # ---- choose kernel path (static decision on static shapes) ----
    w_bytes = jnp.dtype(resident_weight_dtype).itemsize
    tiling = _choose_row_tile(N, tile_rows, V, D, O, w_bytes, vmem_budget_bytes)
    if force_path == "resident":
        use_resident = True
        if tiling is None:
            tiling = _choose_row_tile(N, tile_rows, V, D, O, w_bytes,
                                      float("inf"))
    elif force_path == "gather":
        use_resident = False
    else:
        use_resident = tiling is not None

    if use_resident:
        TM, N_pad = tiling
        pad = N_pad - N
        ids_row = jnp.pad(gather_ids, (0, pad)).reshape(1, N_pad)
        inv_row = jnp.pad(inv_counts, (0, pad)).reshape(1, N_pad)
        embT = jnp.pad(emb_sum, ((0, pad), (0, 0))).T            # (D, N_pad)

        # Resident table: (V, D, O) -> (O, D, V) -> (O*D, V), stored bf16
        # (halves the one-time fetch; all accumulation stays f32).
        wT = jnp.transpose(encoder_weights, (2, 1, 0)).reshape(
            O * D, V).astype(resident_weight_dtype)
        # selT[o, o'*D + d] = (o == o'): sums the D entries of each output slot.
        selT = (jnp.arange(O, dtype=jnp.int32)[:, None] ==
                (jnp.arange(O * D, dtype=jnp.int32)[None, :] // D)
                ).astype(jnp.float32)

        grid_spec = pltpu.PrefetchScalarGridSpec(
            num_scalar_prefetch=0,
            grid=(N_pad // TM,),
            in_specs=[
                pl.BlockSpec((1, TM), lambda i: (0, i)),       # vocab ids
                pl.BlockSpec((1, TM), lambda i: (0, i)),       # 1/count
                pl.BlockSpec((D, TM), lambda i: (0, i)),       # summed emb (T)
                pl.BlockSpec((O * D, V), lambda i: (0, 0)),    # resident table
                pl.BlockSpec((O, O * D), lambda i: (0, 0)),    # selection
            ],
            out_specs=pl.BlockSpec((O, TM), lambda i: (0, i)),
        )

        out_t = pl.pallas_call(
            _encode_resident_kernel,
            out_shape=jax.ShapeDtypeStruct((O, N_pad), jnp.float32),
            grid_spec=grid_spec,
            compiler_params=pltpu.CompilerParams(
                dimension_semantics=("parallel",),   # v7x: shard row tiles
                vmem_limit_bytes=_VMEM_LIMIT_BYTES),
        )(ids_row, inv_row, embT, wT, selT)
        encoded = out_t[:, :N].T                               # (N, O)
    else:
        # Large-vocab fallback: one unique row per step, weight row gathered
        # with a scalar-prefetched, data-dependent index_map.  Rows are sorted
        # by vocab id (jnp.unique), so repeated ids re-use the fetched block.
        avg = (emb_sum * inv_counts[:, None]).reshape(N, 1, D)
        w_f32 = encoder_weights.astype(jnp.float32)

        grid_spec = pltpu.PrefetchScalarGridSpec(
            num_scalar_prefetch=1,
            grid=(N,),
            in_specs=[
                pl.BlockSpec((1, 1, D), lambda i, ids: (i, 0, 0)),
                pl.BlockSpec((1, D, O), lambda i, ids: (ids[i], 0, 0)),
            ],
            out_specs=pl.BlockSpec((1, 1, O), lambda i, ids: (i, 0, 0)),
        )

        out3 = pl.pallas_call(
            _encode_gather_kernel,
            out_shape=jax.ShapeDtypeStruct((N, 1, O), jnp.float32),
            grid_spec=grid_spec,
            compiler_params=pltpu.CompilerParams(
                dimension_semantics=("arbitrary",)),
        )(gather_ids, avg, w_f32)
        encoded = out3[:, 0, :]                                # (N, O)

    return unique_pairs, encoded


if __name__ == "__main__":
    # Small shapes consistent with Encoder(input_dim, output_dim, vocab_size)
    B, S, D, O, V = 2, 8, 32, 8, 64

    key = jax.random.PRNGKey(0)
    k_ids, k_emb, k_w = jax.random.split(key, 3)

    vocab_ids = jax.random.randint(k_ids, (B, S), 0, V, dtype=jnp.int32)
    embeddings = jax.random.normal(k_emb, (B, S, D), dtype=jnp.float32)

    # Deterministic replica of torch.nn.init.kaiming_uniform_(a=sqrt(5)) on a
    # (V, D, O) tensor: fan_in = D * O, bound = 1 / sqrt(fan_in).
    bound = 1.0 / math.sqrt(D * O)
    encoder_weights = jax.random.uniform(
        k_w, (V, D, O), jnp.float32, minval=-bound, maxval=bound)

    # Primary (resident-table) path.
    fwd = jax.jit(encoder_forward)
    pairs, encoded = fwd(vocab_ids, embeddings, encoder_weights)
    jax.block_until_ready((pairs, encoded))

    # Large-vocab gather fallback, forced so both paths are exercised.
    fwd_g = jax.jit(functools.partial(encoder_forward, force_path="gather"))
    pairs_g, encoded_g = fwd_g(vocab_ids, embeddings, encoder_weights)
    jax.block_until_ready((pairs_g, encoded_g))

    # ---- pure-JAX reference of the torch forward on the same padded set ----
    N = B * S
    b_ids = jnp.broadcast_to(jnp.arange(B, dtype=jnp.int32)[:, None], (B, S))
    flat_pairs = jnp.stack([vocab_ids, b_ids], axis=2).reshape(N, 2)
    flat_emb = embeddings.reshape(N, D)
    ref_pairs, inv = jnp.unique(
        flat_pairs, axis=0, return_inverse=True, size=N, fill_value=-1)
    inv = inv.reshape(-1)
    cnt = jax.ops.segment_sum(jnp.ones((N,), jnp.float32), inv, num_segments=N)
    ssum = jax.ops.segment_sum(flat_emb, inv, num_segments=N)
    avg = ssum / jnp.maximum(cnt, 1.0)[:, None]
    w_rows = encoder_weights[jnp.clip(ref_pairs[:, 0], 0, V - 1)]
    ref = jnp.tanh(jnp.einsum('bi,bio->bo', avg, w_rows))
    ref = jnp.where(ref_pairs[:, :1] >= 0, ref, 0.0)

    assert pairs.shape == (N, 2) and encoded.shape == (N, O)
    assert pairs_g.shape == (N, 2) and encoded_g.shape == (N, O)
    assert bool(jnp.all(pairs == ref_pairs))
    assert bool(jnp.all(pairs_g == ref_pairs))
    assert bool(jnp.all(jnp.isfinite(encoded)))
    assert bool(jnp.all(jnp.abs(encoded) <= 1.0))      # tanh range
    err_resident = float(jnp.max(jnp.abs(encoded - ref)))
    err_gather = float(jnp.max(jnp.abs(encoded_g - ref)))
    assert err_resident < 2e-2, err_resident   # bf16 table -> bounded deviation
    assert err_gather < 2e-2, err_gather
    assert float(jnp.max(jnp.abs(encoded - encoded_g))) < 2e-2
    print("KERNEL_OK")
</pallas_src>

<mosaic_0001>
module attributes {stable_mosaic.version = 11 : i64} {
  func.func private @main(%arg0: i32) attributes {dimension_semantics = [#tpu.dimension_semantics<core_parallel>], iteration_bounds = array<i64: 2>, tpu.core_type = #tpu.core_type<sc_scalar_subcore>, window_params = []} {
    return
  }
}

module attributes {stable_mosaic.version = 11 : i64} {
  func.func private @main(%arg0: i32) attributes {dimension_semantics = [#tpu.dimension_semantics<core_parallel>], iteration_bounds = array<i64: 2>, tpu.core_type = #tpu.core_type<sc_scalar_subcore>, window_params = []} {
    return
  }
}

module attributes {stable_mosaic.version = 11 : i64} {
  func.func @_encode_resident_kernel(%arg0: i32, %arg1: memref<1x16xi32, #tpu.memory_space<vmem>>, %arg2: memref<1x16xf32, #tpu.memory_space<vmem>>, %arg3: memref<32x16xf32, #tpu.memory_space<vmem>>, %arg4: memref<256x64xbf16, #tpu.memory_space<vmem>>, %arg5: memref<8x256xf32, #tpu.memory_space<vmem>>, %arg6: memref<8x16xf32, #tpu.memory_space<vmem>>) attributes {dimension_semantics = [#tpu.dimension_semantics<parallel>], iteration_bounds = array<i64: 1>, scalar_prefetch = 0 : i64, scratch_operands = 0 : i64, tpu.core_type = #tpu.core_type<tc>, window_params = [{transform_indices = @transform_0, window_bounds = array<i64: 1, 16>}, {transform_indices = @transform_1, window_bounds = array<i64: 1, 16>}, {transform_indices = @transform_2, window_bounds = array<i64: 32, 16>}, {pipeline_mode = #tpu.pipeline_mode<synchronous>, transform_indices = @transform_3, window_bounds = array<i64: 256, 64>}, {pipeline_mode = #tpu.pipeline_mode<synchronous>, transform_indices = @transform_4, window_bounds = array<i64: 8, 256>}, {transform_indices = @transform_5, window_bounds = array<i64: 8, 16>}]} {
    %c0 = arith.constant 0 : index
    %c0_0 = arith.constant 0 : index
    %0 = vector.load %arg1[%c0, %c0_0] : memref<1x16xi32, #tpu.memory_space<vmem>>, vector<1x16xi32>
    %1 = tpu.iota {dimensions = array<i32: 0>} : vector<64x16xi32>
    %2 = vector.broadcast %0 : vector<1x16xi32> to vector<64x16xi32>
    %3 = arith.cmpi eq, %2, %1 : vector<64x16xi32>
    %4 = arith.extui %3 : vector<64x16xi1> to vector<64x16xi32>
    %5 = arith.sitofp %4 : vector<64x16xi32> to vector<64x16xf32>
    %6 = arith.truncf %5 : vector<64x16xf32> to vector<64x16xbf16>
    %c0_1 = arith.constant 0 : index
    %c0_2 = arith.constant 0 : index
    %7 = vector.load %arg4[%c0_1, %c0_2] : memref<256x64xbf16, #tpu.memory_space<vmem>>, vector<256x64xbf16>
    %cst = arith.constant dense<0.000000e+00> : vector<256x16xf32>
    %8 = tpu.matmul %7, %6, %cst {dimension_numbers = #tpu.dot_dimension_numbers<[1], [0], [0], [1], [0, 0, 1, 1], [], []>} : vector<256x64xbf16>, vector<64x16xbf16>, vector<256x16xf32> -> vector<256x16xf32>
    %c0_3 = arith.constant 0 : index
    %c0_4 = arith.constant 0 : index
    %9 = vector.load %arg3[%c0_3, %c0_4] : memref<32x16xf32, #tpu.memory_space<vmem>>, vector<32x16xf32>
    %c0_5 = arith.constant 0 : index
    %c0_6 = arith.constant 0 : index
    %10 = vector.load %arg2[%c0_5, %c0_6] : memref<1x16xf32, #tpu.memory_space<vmem>>, vector<1x16xf32>
    %11 = vector.broadcast %10 : vector<1x16xf32> to vector<32x16xf32>
    %12 = arith.mulf %9, %11 : vector<32x16xf32>
    %13 = tpu.concatenate %12, %12, %12, %12, %12, %12, %12, %12 in 0 : vector<32x16xf32>, vector<32x16xf32>, vector<32x16xf32>, vector<32x16xf32>, vector<32x16xf32>, vector<32x16xf32>, vector<32x16xf32>, vector<32x16xf32> -> vector<256x16xf32>
    %c0_7 = arith.constant 0 : index
    %c0_8 = arith.constant 0 : index
    %14 = vector.load %arg5[%c0_7, %c0_8] : memref<8x256xf32, #tpu.memory_space<vmem>>, vector<8x256xf32>
    %15 = arith.mulf %13, %8 : vector<256x16xf32>
    %cst_9 = arith.constant dense<0.000000e+00> : vector<8x16xf32>
    %16 = tpu.matmul %14, %15, %cst_9 {dimension_numbers = #tpu.dot_dimension_numbers<[1], [0], [0], [1], [0, 0, 1, 1], [], []>} : vector<8x256xf32>, vector<256x16xf32>, vector<8x16xf32> -> vector<8x16xf32>
    %17 = math.tanh %16 : vector<8x16xf32>
    %c0_10 = arith.constant 0 : index
    %c0_11 = arith.constant 0 : index
    %18 = vector.load %arg6[%c0_10, %c0_11] : memref<8x16xf32, #tpu.memory_space<vmem>>, vector<8x16xf32>
    tpu.vector_store %arg6[%c0_10, %c0_11], %17 {strides = array<i32>} : memref<8x16xf32, #tpu.memory_space<vmem>>, vector<8x16xf32>,
    return
  }
  func.func @transform_0(%arg0: i32) -> (i32, i32) {
    %c0_i32 = arith.constant 0 : i32
    %c0_i32_0 = arith.constant 0 : i32
    return %c0_i32, %arg0 : i32, i32
  }
  func.func @transform_1(%arg0: i32) -> (i32, i32) {
    %c0_i32 = arith.constant 0 : i32
    %c0_i32_0 = arith.constant 0 : i32
    return %c0_i32, %arg0 : i32, i32
  }
  func.func @transform_2(%arg0: i32) -> (i32, i32) {
    %c0_i32 = arith.constant 0 : i32
    %c0_i32_0 = arith.constant 0 : i32
    return %c0_i32, %arg0 : i32, i32
  }
  func.func @transform_3(%arg0: i32) -> (i32, i32) {
    %c0_i32 = arith.constant 0 : i32
    %c0_i32_0 = arith.constant 0 : i32
    %c0_i32_1 = arith.constant 0 : i32
    return %c0_i32, %c0_i32_0 : i32, i32
  }
  func.func @transform_4(%arg0: i32) -> (i32, i32) {
    %c0_i32 = arith.constant 0 : i32
    %c0_i32_0 = arith.constant 0 : i32
    %c0_i32_1 = arith.constant 0 : i32
    return %c0_i32, %c0_i32_0 : i32, i32
  }
  func.func @transform_5(%arg0: i32) -> (i32, i32) {
    %c0_i32 = arith.constant 0 : i32
    %c0_i32_0 = arith.constant 0 : i32
    return %c0_i32, %arg0 : i32, i32
  }
}

</mosaic_0001>

<llo_original>
// kernel: encoder_forward.1
$region0: #{encoder_forward.1}
  #allocation0 [shape = 'u32[]', space=smem, size = 0x4, offset = 0x4, fixed_abs, tag = 'smem constant byte address 0x4 - core index']
  #allocation1 [shape = 'u32[144,128]{1,0:T(1,128)}', space=vmem, size = 0x12000, scoped, tag = 'internal scratch']
  %s0 = inlined_call_operand.vmem [shape: s32[1,16], index: 0, kind: input, shape index: {}]
  %s1 = inlined_call_operand.vmem [shape: f32[1,16], index: 1, kind: input, shape index: {}]
  %s2 = inlined_call_operand.vmem [shape: f32[32,16], index: 2, kind: input, shape index: {}]
  %s3 = inlined_call_operand.vmem [shape: bf16[256,64], index: 3, kind: input, shape index: {}]
  %s4 = inlined_call_operand.vmem [shape: f32[8,256], index: 4, kind: input, shape index: {}]
  %s5 = inlined_call_operand.hbm [shape: f32[8,16], index: 5, kind: output, shape index: {}]
  %s6 = sld [smem:[#allocation0]]
  $region30: #{encoder_forward.1} parent=0
    _
  %s8 = ssub.s32 1, %s6
  %s9 = scalar_select 0, %s8, %s6
  $region1: #{encoder_forward.1} parent=0
    #allocation2 [shape = 'u8[4096]{0}', space=vmem, size = 0x1000, scoped, tag = 'output window, operand 0, single buffered']
    #allocation3 [shape = 's32[1]{0}', space=sflag, size = 0x4, scoped, tag = 'scoped memory for encoder_forward.1']
    %10 = vsyncpa [#allocation3], 0
    // Predicated region
    $region2: #{encoder_forward.1} parent=1 // pred_check
      _
    $region3: #{encoder_forward.1} parent=1 // pred_check_branch
      %12 = sbr.rel (0) target = $region5
    $region4: #{encoder_forward.1} parent=1 // pred_region
      _
    $region5: #{encoder_forward.1} parent=1 // pred_fallthru
      _
    // Predicated region
    $region6: #{encoder_forward.1} parent=1 // pred_check
      _
    $region7: #{encoder_forward.1} parent=1 // pred_check_branch
      %14 = sbr.rel (0) target = $region9
    $region8: #{encoder_forward.1} parent=1 // pred_region
      _
    $region9: #{encoder_forward.1} parent=1 // pred_fallthru
      _
    // Predicated region
    $region10: #{encoder_forward.1} parent=1 // pred_check
      _
    $region11: #{encoder_forward.1} parent=1 // pred_check_branch
      %16 = sbr.rel (0) target = $region13
    $region12: #{encoder_forward.1} parent=1 // pred_region
      _
    $region13: #{encoder_forward.1} parent=1 // pred_fallthru
      _
    // Predicated region
    $region14: #{encoder_forward.1} parent=1 // pred_check
      _
    $region15: #{encoder_forward.1} parent=1 // pred_check_branch
      %18 = sbr.rel (0) target = $region17
    $region16: #{encoder_forward.1} parent=1 // pred_region
      _
    $region17: #{encoder_forward.1} parent=1 // pred_fallthru
      _
    // Predicated region
    $region18: #{encoder_forward.1} parent=1 // pred_check
      _
    $region19: #{encoder_forward.1} parent=1 // pred_check_branch
      %20 = sbr.rel (0) target = $region21
    $region20: #{encoder_forward.1} parent=1 // pred_region
      _
    $region21: #{encoder_forward.1} parent=1 // pred_fallthru
      _
    %v22 = vld [vmem:[%s0] sm:$0x1]
    %v23 = vlaneseq
    %v24 = vshrl.u32 %v23, 7
    %v25 = vadd.s32 %v24, 8
    %v26 = vadd.s32 %v24, 16
    %v27 = vadd.s32 %v24, 24
    %v28 = vadd.s32 %v24, 32
    %v29 = vadd.s32 %v24, 40
    %v30 = vadd.s32 %v24, 48
    %v31 = vadd.s32 %v24, 56
    %v32 = vlaneseq
    %v33 = vshrl.u32 %v32, 7
    %v34 = vsub.s32 0, %v33
    %v35 = vrot.slane %v22, %v34
    %vm36 = vcmp.eq.s32.totalorder %v35, %v24
    %vm37 = vcmp.eq.s32.totalorder %v35, %v25
    %vm38 = vcmp.eq.s32.totalorder %v35, %v26
    %vm39 = vcmp.eq.s32.totalorder %v35, %v27
    %vm40 = vcmp.eq.s32.totalorder %v35, %v28
    %vm41 = vcmp.eq.s32.totalorder %v35, %v29
    %vm42 = vcmp.eq.s32.totalorder %v35, %v30
    %vm43 = vcmp.eq.s32.totalorder %v35, %v31
    %v44 = vsel %vm36, 1, 0
    %v45 = vsel %vm37, 1, 0
    %v46 = vsel %vm38, 1, 0
    %v47 = vsel %vm39, 1, 0
    %v48 = vsel %vm40, 1, 0
    %v49 = vsel %vm41, 1, 0
    %v50 = vsel %vm42, 1, 0
    %v51 = vsel %vm43, 1, 0
    %v52 = vcvt.s32.f32 %v44
    %v53 = vcvt.s32.f32 %v45
    %v54 = vcvt.s32.f32 %v46
    %v55 = vcvt.s32.f32 %v47
    %v56 = vcvt.s32.f32 %v48
    %v57 = vcvt.s32.f32 %v49
    %v58 = vcvt.s32.f32 %v50
    %v59 = vcvt.s32.f32 %v51
    %v60 = vpack.c.bf16 %v53, %v52
    %v61 = vpack.c.bf16 %v55, %v54
    %v62 = vpack.c.bf16 %v57, %v56
    %v63 = vpack.c.bf16 %v59, %v58
    %v64 = vld [vmem:[%s3] sm:$0xf]
    %v65 = vld [vmem:[%s3 + $0x4] sm:$0xf]
    %v66 = vld [vmem:[%s3 + $0x8] sm:$0xf]
    %v67 = vld [vmem:[%s3 + $0xc] sm:$0xf]
    %v68 = vld [vmem:[%s3 + $0x10] sm:$0xf]
    %v69 = vld [vmem:[%s3 + $0x14] sm:$0xf]
    %v70 = vld [vmem:[%s3 + $0x18] sm:$0xf]
    %v71 = vld [vmem:[%s3 + $0x1c] sm:$0xf]
    %v72 = vld [vmem:[%s3 + $0x20] sm:$0xf]
    %v73 = vld [vmem:[%s3 + $0x24] sm:$0xf]
    %v74 = vld [vmem:[%s3 + $0x28] sm:$0xf]
    %v75 = vld [vmem:[%s3 + $0x2c] sm:$0xf]
    %v76 = vld [vmem:[%s3 + $0x30] sm:$0xf]
    %v77 = vld [vmem:[%s3 + $0x34] sm:$0xf]
    %v78 = vld [vmem:[%s3 + $0x38] sm:$0xf]
    %v79 = vld [vmem:[%s3 + $0x3c] sm:$0xf]
    %v80 = vld [vmem:[%s3 + $0x40] sm:$0xf]
    %v81 = vld [vmem:[%s3 + $0x44] sm:$0xf]
    %v82 = vld [vmem:[%s3 + $0x48] sm:$0xf]
    %v83 = vld [vmem:[%s3 + $0x4c] sm:$0xf]
    %v84 = vld [vmem:[%s3 + $0x50] sm:$0xf]
    %v85 = vld [vmem:[%s3 + $0x54] sm:$0xf]
    %v86 = vld [vmem:[%s3 + $0x58] sm:$0xf]
    %v87 = vld [vmem:[%s3 + $0x5c] sm:$0xf]
    %v88 = vld [vmem:[%s3 + $0x60] sm:$0xf]
    %v89 = vld [vmem:[%s3 + $0x64] sm:$0xf]
    %v90 = vld [vmem:[%s3 + $0x68] sm:$0xf]
    %v91 = vld [vmem:[%s3 + $0x6c] sm:$0xf]
    %v92 = vld [vmem:[%s3 + $0x70] sm:$0xf]
    %v93 = vld [vmem:[%s3 + $0x74] sm:$0xf]
    %v94 = vld [vmem:[%s3 + $0x78] sm:$0xf]
    %v95 = vld [vmem:[%s3 + $0x7c] sm:$0xf]
    %v128 = vunpack.c.l.b16 %v64
    %v129 = vunpack.c.l.b16 %v65
    %v130 = vunpack.c.l.b16 %v66
    %v131 = vunpack.c.l.b16 %v67
    %v132 = vunpack.c.l.b16 %v68
    %v133 = vunpack.c.l.b16 %v69
    %v134 = vunpack.c.l.b16 %v70
    %v135 = vunpack.c.l.b16 %v71
    %v136 = vunpack.c.l.b16 %v72
    %v137 = vunpack.c.l.b16 %v73
    %v138 = vunpack.c.l.b16 %v74
    %v139 = vunpack.c.l.b16 %v75
    %v140 = vunpack.c.l.b16 %v76
    %v141 = vunpack.c.l.b16 %v77
    %v142 = vunpack.c.l.b16 %v78
    %v143 = vunpack.c.l.b16 %v79
    %v144 = vunpack.c.l.b16 %v80
    %v145 = vunpack.c.l.b16 %v81
    %v146 = vunpack.c.l.b16 %v82
    %v147 = vunpack.c.l.b16 %v83
    %v148 = vunpack.c.l.b16 %v84
    %v149 = vunpack.c.l.b16 %v85
    %v150 = vunpack.c.l.b16 %v86
    %v151 = vunpack.c.l.b16 %v87
    %v152 = vunpack.c.l.b16 %v88
    %v153 = vunpack.c.l.b16 %v89
    %v154 = vunpack.c.l.b16 %v90
    %v155 = vunpack.c.l.b16 %v91
    %v156 = vunpack.c.l.b16 %v92
    %v157 = vunpack.c.l.b16 %v93
    %v158 = vunpack.c.l.b16 %v94
    %v159 = vunpack.c.l.b16 %v95
    %v160 = vpack.c.b16 %v129, %v128
    %v161 = vpack.c.b16 %v131, %v130
    %v162 = vpack.c.b16 %v133, %v132
    %v163 = vpack.c.b16 %v135, %v134
    %v164 = vpack.c.b16 %v137, %v136
    %v165 = vpack.c.b16 %v139, %v138
    %v166 = vpack.c.b16 %v141, %v140
    %v167 = vpack.c.b16 %v143, %v142
    %v168 = vpack.c.b16 %v145, %v144
    %v169 = vpack.c.b16 %v147, %v146
    %v170 = vpack.c.b16 %v149, %v148
    %v171 = vpack.c.b16 %v151, %v150
    %v172 = vpack.c.b16 %v153, %v152
    %v173 = vpack.c.b16 %v155, %v154
    %v174 = vpack.c.b16 %v157, %v156
    %v175 = vpack.c.b16 %v159, %v158
    %vm176 = vcmask 523264
    %v178 = vsel %vm176, %v160, 0
    %v181 = vsel %vm176, %v161, 0
    %v184 = vsel %vm176, %v162, 0
    %v187 = vsel %vm176, %v163, 0
    %v190 = vsel %vm176, %v164, 0
    %v193 = vsel %vm176, %v165, 0
    %v196 = vsel %vm176, %v166, 0
    %v199 = vsel %vm176, %v167, 0
    %v202 = vsel %vm176, %v168, 0
    %v205 = vsel %vm176, %v169, 0
    %v208 = vsel %vm176, %v170, 0
    %v211 = vsel %vm176, %v171, 0
    %v214 = vsel %vm176, %v172, 0
    %v217 = vsel %vm176, %v173, 0
    %v220 = vsel %vm176, %v174, 0
    %v223 = vsel %vm176, %v175, 0
    %225 = vmatprep.subr.bf16.mxu0 0
    %226 = vmatpush1.bf16.msra.mxu0 %v60
    %227 = vmatprep.subr.bf16.mxu0 0
    %228 = vmatpush1.bf16.msra.mxu0 %v61
    %229 = vmatprep.subr.bf16.mxu0 0
    %230 = vmatpush1.bf16.msra.mxu0 %v62
    %231 = vmatprep.subr.bf16.mxu0 0
    %232 = vmatpush1.bf16.msra.mxu0 %v63
    %233 = vmatprep.subr.bf16.mxu0 0
    %234 = vmatpush1.bf16.msra.mxu0 0
    %235 = vmatprep.subr.bf16.mxu0 0
    %236 = vmatpush1.bf16.msra.mxu0 0
    %237 = vmatprep.subr.bf16.mxu0 0
    %238 = vmatpush1.bf16.msra.mxu0 0
    %239 = vmatprep.subr.bf16.mxu0 0
    %240 = vmatpush1.bf16.msra.mxu0 0
    %241 = vmatprep.subr.bf16.mxu0 0
    %242 = vmatpush1.bf16.msra.mxu0 0
    %243 = vmatprep.subr.bf16.mxu0 0
    %244 = vmatpush1.bf16.msra.mxu0 0
    %245 = vmatprep.subr.bf16.mxu0 0
    %246 = vmatpush1.bf16.msra.mxu0 0
    %247 = vmatprep.subr.bf16.mxu0 0
    %248 = vmatpush1.bf16.msra.mxu0 0
    %249 = vmatprep.subr.bf16.mxu0 0
    %250 = vmatpush1.bf16.msra.mxu0 0
    %251 = vmatprep.subr.bf16.mxu0 0
    %252 = vmatpush1.bf16.msra.mxu0 0
    %253 = vmatprep.subr.bf16.mxu0 0
    %254 = vmatpush1.bf16.msra.mxu0 0
    %255 = vmatprep.subr.bf16.mxu0 0
    %256 = vmatpush1.bf16.msra.mxu0 0
    %257 = vmatprep.mubr.bf16.mxu0 0
    %258 = vmatmul.mubr.bf16.gmra.mrb[0].mxu0 %v178
    %v259 = vpop.f32.mrb[0].mxu0
    %v260 = vadd.f32 0.0, %v259
    %v261 = vpop.f32.mrb[0].mxu0
    %v262 = vpop.f32.mrb[0].mxu0
    %v263 = vadd.f32 0.0, %v262
    %v264 = vpop.f32.mrb[0].mxu0
    %265 = vmatprep.mubr.bf16.mxu0 0
    %266 = vmatmul.mubr.bf16.gmra.mrb[0].mxu0 %v181
    %v267 = vpop.f32.mrb[0].mxu0
    %v268 = vadd.f32 0.0, %v267
    %v269 = vpop.f32.mrb[0].mxu0
    %v270 = vpop.f32.mrb[0].mxu0
    %v271 = vadd.f32 0.0, %v270
    %v272 = vpop.f32.mrb[0].mxu0
    %273 = vmatprep.mubr.bf16.mxu0 0
    %274 = vmatmul.mubr.bf16.gmra.mrb[0].mxu0 %v184
    %v275 = vpop.f32.mrb[0].mxu0
    %v276 = vadd.f32 0.0, %v275
    %v277 = vpop.f32.mrb[0].mxu0
    %v278 = vpop.f32.mrb[0].mxu0
    %v279 = vadd.f32 0.0, %v278
    %v280 = vpop.f32.mrb[0].mxu0
    %281 = vmatprep.mubr.bf16.mxu0 0
    %282 = vmatmul.mubr.bf16.gmra.mrb[0].mxu0 %v187
    %v283 = vpop.f32.mrb[0].mxu0
    %v284 = vadd.f32 0.0, %v283
    %v285 = vpop.f32.mrb[0].mxu0
    %v286 = vpop.f32.mrb[0].mxu0
    %v287 = vadd.f32 0.0, %v286
    %v288 = vpop.f32.mrb[0].mxu0
    %289 = vmatprep.mubr.bf16.mxu0 0
    %290 = vmatmul.mubr.bf16.gmra.mrb[0].mxu0 %v190
    %v291 = vpop.f32.mrb[0].mxu0
    %v292 = vadd.f32 0.0, %v291
    %v293 = vpop.f32.mrb[0].mxu0
    %v294 = vpop.f32.mrb[0].mxu0
    %v295 = vadd.f32 0.0, %v294
    %v296 = vpop.f32.mrb[0].mxu0
    %297 = vmatprep.mubr.bf16.mxu0 0
    %298 = vmatmul.mubr.bf16.gmra.mrb[0].mxu0 %v193
    %v299 = vpop.f32.mrb[0].mxu0
    %v300 = vadd.f32 0.0, %v299
    %v301 = vpop.f32.mrb[0].mxu0
    %v302 = vpop.f32.mrb[0].mxu0
    %v303 = vadd.f32 0.0, %v302
    %v304 = vpop.f32.mrb[0].mxu0
    %305 = vmatprep.mubr.bf16.mxu0 0
    %306 = vmatmul.mubr.bf16.gmra.mrb[0].mxu0 %v196
    %v307 = vpop.f32.mrb[0].mxu0
    %v308 = vadd.f32 0.0, %v307
    %v309 = vpop.f32.mrb[0].mxu0
    %v310 = vpop.f32.mrb[0].mxu0
    %v311 = vadd.f32 0.0, %v310
    %v312 = vpop.f32.mrb[0].mxu0
    %313 = vmatprep.mubr.bf16.mxu0 0
    %314 = vmatmul.mubr.bf16.gmra.mrb[0].mxu0 %v199
    %v315 = vpop.f32.mrb[0].mxu0
    %v316 = vadd.f32 0.0, %v315
    %v317 = vpop.f32.mrb[0].mxu0
    %v318 = vpop.f32.mrb[0].mxu0
    %v319 = vadd.f32 0.0, %v318
    %v320 = vpop.f32.mrb[0].mxu0
    %321 = vmatprep.mubr.bf16.mxu0 0
    %322 = vmatmul.mubr.bf16.gmra.mrb[0].mxu0 %v202
    %v323 = vpop.f32.mrb[0].mxu0
    %v324 = vadd.f32 0.0, %v323
    %v325 = vpop.f32.mrb[0].mxu0
    %v326 = vpop.f32.mrb[0].mxu0
    %v327 = vadd.f32 0.0, %v326
    %v328 = vpop.f32.mrb[0].mxu0
    %329 = vmatprep.mubr.bf16.mxu0 0
    %330 = vmatmul.mubr.bf16.gmra.mrb[0].mxu0 %v205
    %v331 = vpop.f32.mrb[0].mxu0
    %v332 = vadd.f32 0.0, %v331
    %v333 = vpop.f32.mrb[0].mxu0
    %v334 = vpop.f32.mrb[0].mxu0
    %v335 = vadd.f32 0.0, %v334
    %v336 = vpop.f32.mrb[0].mxu0
    %337 = vmatprep.mubr.bf16.mxu0 0
    %338 = vmatmul.mubr.bf16.gmra.mrb[0].mxu0 %v208
    %v339 = vpop.f32.mrb[0].mxu0
    %v340 = vadd.f32 0.0, %v339
    %v341 = vpop.f32.mrb[0].mxu0
    %v342 = vpop.f32.mrb[0].mxu0
    %v343 = vadd.f32 0.0, %v342
    %v344 = vpop.f32.mrb[0].mxu0
    %345 = vmatprep.mubr.bf16.mxu0 0
    %346 = vmatmul.mubr.bf16.gmra.mrb[0].mxu0 %v211
    %v347 = vpop.f32.mrb[0].mxu0
    %v348 = vadd.f32 0.0, %v347
    %v349 = vpop.f32.mrb[0].mxu0
    %v350 = vpop.f32.mrb[0].mxu0
    %v351 = vadd.f32 0.0, %v350
    %v352 = vpop.f32.mrb[0].mxu0
    %353 = vmatprep.mubr.bf16.mxu0 0
    %354 = vmatmul.mubr.bf16.gmra.mrb[0].mxu0 %v214
    %v355 = vpop.f32.mrb[0].mxu0
    %v356 = vadd.f32 0.0, %v355
    %v357 = vpop.f32.mrb[0].mxu0
    %v358 = vpop.f32.mrb[0].mxu0
    %v359 = vadd.f32 0.0, %v358
    %v360 = vpop.f32.mrb[0].mxu0
    %361 = vmatprep.mubr.bf16.mxu0 0
    %362 = vmatmul.mubr.bf16.gmra.mrb[0].mxu0 %v217
    %v363 = vpop.f32.mrb[0].mxu0
    %v364 = vadd.f32 0.0, %v363
    %v365 = vpop.f32.mrb[0].mxu0
    %v366 = vpop.f32.mrb[0].mxu0
    %v367 = vadd.f32 0.0, %v366
    %v368 = vpop.f32.mrb[0].mxu0
    %369 = vmatprep.mubr.bf16.mxu0 0
    %370 = vmatmul.mubr.bf16.gmra.mrb[0].mxu0 %v220
    %v371 = vpop.f32.mrb[0].mxu0
    %v372 = vadd.f32 0.0, %v371
    %v373 = vpop.f32.mrb[0].mxu0
    %v374 = vpop.f32.mrb[0].mxu0
    %v375 = vadd.f32 0.0, %v374
    %v376 = vpop.f32.mrb[0].mxu0
    %377 = vmatprep.mubr.bf16.mxu0 0
    %378 = vmatmul.mubr.bf16.gmra.mrb[0].mxu0 %v223
    %v379 = vpop.f32.mrb[0].mxu0
    %v380 = vadd.f32 0.0, %v379
    %v381 = vpop.f32.mrb[0].mxu0
    %v382 = vpop.f32.mrb[0].mxu0
    %v383 = vadd.f32 0.0, %v382
    %v384 = vpop.f32.mrb[0].mxu0
    %385 = vdwg.mxu0
    %v386 = vld [vmem:[%s2] sm:$0xff]
    %v387 = vld [vmem:[%s2 + $0x8] sm:$0xff]
    %v388 = vld [vmem:[%s2 + $0x10] sm:$0xff]
    %v389 = vld [vmem:[%s2 + $0x18] sm:$0xff]
    %v390 = vld [vmem:[%s1] sm:$0x1]
    %v392 = vlaneseq
    %v393 = vshrl.u32 %v392, 7
    %v394 = vsub.s32 0, %v393
    %v395 = vrot.slane %v390, %v394
    %v397 = vmul.f32 %v386, %v395
    %v398 = vmul.f32 %v387, %v395
    %v399 = vmul.f32 %v388, %v395
    %v400 = vmul.f32 %v389, %v395
    %v401 = vld [vmem:[%s4] sm:$0xff]
    %v402 = vld [vmem:[%s4 + $0x8] sm:$0xff]
    %v403 = vmul.f32 %v397, %v260
    %v404 = vmul.f32 %v398, %v263
    %v405 = vmul.f32 %v399, %v268
    %v406 = vmul.f32 %v400, %v271
    %v407 = vmul.f32 %v397, %v276
    %v408 = vmul.f32 %v398, %v279
    %v409 = vmul.f32 %v399, %v284
    %v410 = vmul.f32 %v400, %v287
    %v411 = vmul.f32 %v397, %v292
    %v412 = vmul.f32 %v398, %v295
    %v413 = vmul.f32 %v399, %v300
    %v414 = vmul.f32 %v400, %v303
    %v415 = vmul.f32 %v397, %v308
    %v416 = vmul.f32 %v398, %v311
    %v417 = vmul.f32 %v399, %v316
    %v418 = vmul.f32 %v400, %v319
    %v419 = vmul.f32 %v397, %v324
    %v420 = vmul.f32 %v398, %v327
    %v421 = vmul.f32 %v399, %v332
    %v422 = vmul.f32 %v400, %v335
    %v423 = vmul.f32 %v397, %v340
    %v424 = vmul.f32 %v398, %v343
    %v425 = vmul.f32 %v399, %v348
    %v426 = vmul.f32 %v400, %v351
    %v427 = vmul.f32 %v397, %v356
    %v428 = vmul.f32 %v398, %v359
    %v429 = vmul.f32 %v399, %v364
    %v430 = vmul.f32 %v400, %v367
    %v431 = vmul.f32 %v397, %v372
    %v432 = vmul.f32 %v398, %v375
    %v433 = vmul.f32 %v399, %v380
    %v434 = vmul.f32 %v400, %v383
    %435 = vmatprep.subr.mxu0 0.0
    %436 = vmatpush1.msra.mxu0 %v403
    %437 = vmatprep.subr.mxu0 0.0
    %438 = vmatpush1.msra.mxu0 %v404
    %439 = vmatprep.subr.mxu0 0.0
    %440 = vmatpush1.msra.mxu0 %v405
    %441 = vmatprep.subr.mxu0 0.0
    %442 = vmatpush1.msra.mxu0 %v406
    %443 = vmatprep.subr.mxu0 0.0
    %444 = vmatpush1.msra.mxu0 %v407
    %445 = vmatprep.subr.mxu0 0.0
    %446 = vmatpush1.msra.mxu0 %v408
    %447 = vmatprep.subr.mxu0 0.0
    %448 = vmatpush1.msra.mxu0 %v409
    %449 = vmatprep.subr.mxu0 0.0
    %450 = vmatpush1.msra.mxu0 %v410
    %451 = vmatprep.subr.mxu0 0.0
    %452 = vmatpush1.msra.mxu0 %v411
    %453 = vmatprep.subr.mxu0 0.0
    %454 = vmatpush1.msra.mxu0 %v412
    %455 = vmatprep.subr.mxu0 0.0
    %456 = vmatpush1.msra.mxu0 %v413
    %457 = vmatprep.subr.mxu0 0.0
    %458 = vmatpush1.msra.mxu0 %v414
    %459 = vmatprep.subr.mxu0 0.0
    %460 = vmatpush1.msra.mxu0 %v415
    %461 = vmatprep.subr.mxu0 0.0
    %462 = vmatpush1.msra.mxu0 %v416
    %463 = vmatprep.subr.mxu0 0.0
    %464 = vmatpush1.msra.mxu0 %v417
    %465 = vmatprep.subr.mxu0 0.0
    %466 = vmatpush1.msra.mxu0 %v418
    %467 = vmatprep.subr.mxu0 0.0
    %468 = vmatpush1.msra.mxu0 %v419
    %469 = vmatprep.subr.mxu0 0.0
    %470 = vmatpush1.msra.mxu0 %v420
    %471 = vmatprep.subr.mxu0 0.0
    %472 = vmatpush1.msra.mxu0 %v421
    %473 = vmatprep.subr.mxu0 0.0
    %474 = vmatpush1.msra.mxu0 %v422
    %475 = vmatprep.subr.mxu0 0.0
    %476 = vmatpush1.msra.mxu0 %v423
    %477 = vmatprep.subr.mxu0 0.0
    %478 = vmatpush1.msra.mxu0 %v424
    %479 = vmatprep.subr.mxu0 0.0
    %480 = vmatpush1.msra.mxu0 %v425
    %481 = vmatprep.subr.mxu0 0.0
    %482 = vmatpush1.msra.mxu0 %v426
    %483 = vmatprep.subr.mxu0 0.0
    %484 = vmatpush1.msra.mxu0 %v427
    %485 = vmatprep.subr.mxu0 0.0
    %486 = vmatpush1.msra.mxu0 %v428
    %487 = vmatprep.subr.mxu0 0.0
    %488 = vmatpush1.msra.mxu0 %v429
    %489 = vmatprep.subr.mxu0 0.0
    %490 = vmatpush1.msra.mxu0 %v430
    %491 = vmatprep.subr.mxu0 0.0
    %492 = vmatpush1.msra.mxu0 %v431
    %493 = vmatprep.subr.mxu0 0.0
    %494 = vmatpush1.msra.mxu0 %v432
    %495 = vmatprep.subr.mxu0 0.0
    %496 = vmatpush1.msra.mxu0 %v433
    %497 = vmatprep.subr.mxu0 0.0
    %498 = vmatpush1.msra.mxu0 %v434
    %499 = vmatprep.mubr.f32.mxu0 %v402
    %500 = vmatmul.mubr.f32.gmra.mrb[0].mxu0 %v401
    %v501 = vpop.f32.mrb[0].mxu0
    %v502 = vadd.f32 0.0, %v501
    %v503 = vpop.f32.mrb[0].mxu0
    %504 = vdwg.mxu0
    %v505 = vtanh.pop %v502
    %vm506 = vcmask 130048
    %507 = vst.msk [vmem:[#allocation2] sm:$0xff] %vm506, %v505
    // Predicated region
    $region22: #{encoder_forward.1} parent=1 // pred_check
      _
    $region23: #{encoder_forward.1} parent=1 // pred_check_branch
      %509 = sbr.rel (0) target = $region25
    $region24: #{encoder_forward.1} parent=1 // pred_region
      %s511 = ssub.s32 128, 128
      %512 = vsyncadd [#allocation3], %s511
      %s514 = sshll.u32 [#allocation2], 4
      %s515 = int_to_ptr.vmem [resolvable:$true] %s514
      %517 = dma.vmem_to_hbm [thread:$0]  %s515, 128, %s5, [#allocation3]
    $region25: #{encoder_forward.1} parent=1 // pred_fallthru
      _
    // Predicated region
    $region26: #{encoder_forward.1} parent=1 // pred_check
      _
    $region27: #{encoder_forward.1} parent=1 // pred_check_branch
      %519 = sbr.rel (0) target = $region29
    $region28: #{encoder_forward.1} parent=1 // pred_region
      %520 = dma.done [#allocation3], 128
    $region29: #{encoder_forward.1} parent=1 // pred_fallthru
      _
    %521 = vsyncpa [#allocation3], 1

</llo_original>
